<compile_context>
chip_gen: v7x
topology: tpu7x:2x2x1
jax: 0.10.0
libtpu: 0.0.40
codegen_flags: <defaults>
</compile_context>

<pallas_src>
import functools

import jax
import jax.numpy as jnp
from jax.experimental import pallas as pl
from jax.experimental.pallas import tpu as pltpu


# ----------------------------------------------------------------------------
# In-kernel helpers
# ----------------------------------------------------------------------------
def _conv3x3_one_matmul(xf, band_ref, bias_row, not_first, not_last):
    """3x3 'same' conv of a lane-flattened (N*H, W*Cin) f32 tile.

    LHS = [x[h-1] | x[h] | x[h+1]] along lanes (zeroed at H boundaries via the
    (N*H,1) masks, which also kill cross-sample leakage of the sublane rolls),
    contracted in ONE MXU push against the K-concatenated banded weights.
    """
    nh = xf.shape[0]
    up = jnp.where(not_first, pltpu.roll(xf, shift=1, axis=0), 0.0)       # x[h-1]
    dn = jnp.where(not_last, pltpu.roll(xf, shift=nh - 1, axis=0), 0.0)   # x[h+1]
    lhs = jnp.concatenate([up, xf, dn], axis=1).astype(jnp.bfloat16)
    acc = jnp.dot(lhs, band_ref[...], preferred_element_type=jnp.float32)
    return acc + bias_row                                                 # f32


def _bn_relu(acc, fold, g_row, be_row, inv_count, eps):
    """Training-mode BatchNorm (biased batch variance, two-pass) + ReLU.

    Per-lane sums are folded to per-channel (and broadcast back to the lane
    layout) with a tiny f32 matmul against the 0/1 channel-fold matrix.
    """
    s = jnp.sum(acc, axis=0, keepdims=True)                               # (1, WC)
    mean = jnp.dot(s, fold, preferred_element_type=jnp.float32) * inv_count
    d = acc - mean
    q = jnp.sum(d * d, axis=0, keepdims=True)
    var = jnp.dot(q, fold, preferred_element_type=jnp.float32) * inv_count
    scale = g_row * jax.lax.rsqrt(var + eps)
    return jnp.maximum(d * scale + be_row, 0.0)                           # f32


# ----------------------------------------------------------------------------
# Fused ConvBlock kernel (single grid step; everything stays in VMEM)
# ----------------------------------------------------------------------------
def _conv_block_kernel(x_ref, band1_ref, b1_ref, g1_ref, be1_ref,
                       band2_ref, b2_ref, g2_ref, be2_ref, fold_ref,
                       o_ref, *, H, inv_count, eps):
    nh = x_ref.shape[0]
    fold = fold_ref[...]

    # (N*H, 1) H-boundary masks, broadcast across lanes (cheap column compare).
    hrow = jax.lax.broadcasted_iota(jnp.int32, (nh, 1), 0) % H
    not_first = hrow >= 1          # output row h has a valid h-1 neighbour
    not_last = hrow <= H - 2       # output row h has a valid h+1 neighbour

    xf = x_ref[...].astype(jnp.float32)                                   # (N*H, W*Cin)

    acc1 = _conv3x3_one_matmul(xf, band1_ref, b1_ref[...], not_first, not_last)
    y1 = _bn_relu(acc1, fold, g1_ref[...], be1_ref[...], inv_count, eps)

    acc2 = _conv3x3_one_matmul(y1, band2_ref, b2_ref[...], not_first, not_last)
    y2 = _bn_relu(acc2, fold, g2_ref[...], be2_ref[...], inv_count, eps)

    o_ref[...] = y2.astype(o_ref.dtype)                                   # lane-dense store


# ----------------------------------------------------------------------------
# One-time parameter preparation (outside the per-call trace)
# ----------------------------------------------------------------------------
def _band_cat(w_hwio, W):
    """K-concatenated W-banded (block-Toeplitz) weights, (3*W*Cin, W*Cout).

    band[kh*W*Cin + (w+kw-1)*Cin + ci, w*Cout + co] = w_hwio[kh, kw, ci, co],
    zero outside the valid W range ('same' padding along W baked in).
    """
    KH, KW, _, _ = w_hwio.shape
    w = w_hwio.astype(jnp.float32)
    bands = []
    for kh in range(KH):
        b = sum(jnp.kron(jnp.eye(W, k=1 - kw, dtype=jnp.float32), w[kh, kw])
                for kw in range(KW))
        bands.append(b)
    return jnp.concatenate(bands, axis=0)


def prepare_conv_block_params(params, W):
    """Precompute bands / fold matrix / per-lane rows once (cache & reuse)."""
    Cout = params["w1"].shape[-1]

    def row(v):  # per-channel (C,) -> per-lane (1, W*C) matching w*C+c layout
        return jnp.tile(v.astype(jnp.float32), W).reshape(1, W * Cout)

    idx = jnp.arange(W * Cout)
    fold = (idx[:, None] % Cout == idx[None, :] % Cout).astype(jnp.float32)

    return {
        "band1": _band_cat(params["w1"], W).astype(jnp.bfloat16),  # (3*W*Cin, W*Cout)
        "band2": _band_cat(params["w2"], W).astype(jnp.bfloat16),  # (3*W*Cout, W*Cout)
        "b1": row(params["b1"]), "g1": row(params["g1"]), "be1": row(params["be1"]),
        "b2": row(params["b2"]), "g2": row(params["g2"]), "be2": row(params["be2"]),
        "fold": fold,                                              # (W*Cout, W*Cout)
    }


# ----------------------------------------------------------------------------
# Forward
# ----------------------------------------------------------------------------
def conv_block_forward(x_nchw, prep, eps=1e-5, out_dtype=jnp.float32):
    """ConvBlock forward.  Input/output layout: NCHW (PyTorch convention).

    Set out_dtype=jnp.bfloat16 to halve the final HBM writeback if the
    consumer tolerates it.
    """
    N, Cin, H, W = x_nchw.shape
    WCin = W * Cin
    WCout = prep["band1"].shape[1]
    NH = N * H

    # NCHW -> channels-last with (W, C) merged onto lanes and N folded into
    # the matmul M dimension; bf16 input halves the conv1 DMA (bf16 MXU
    # operand either way).
    x2d = jnp.transpose(x_nchw, (0, 2, 3, 1)).reshape(NH, WCin).astype(jnp.bfloat16)

    kern = functools.partial(_conv_block_kernel, H=H,
                             inv_count=1.0 / float(N * H * W), eps=float(eps))

    out2d = pl.pallas_call(
        kern,
        grid=(1,),
        in_specs=[
            pl.BlockSpec((NH, WCin), lambda i: (0, 0)),           # x
            pl.BlockSpec((3 * WCin, WCout), lambda i: (0, 0)),    # band1
            pl.BlockSpec((1, WCout), lambda i: (0, 0)),           # b1 row
            pl.BlockSpec((1, WCout), lambda i: (0, 0)),           # gamma1 row
            pl.BlockSpec((1, WCout), lambda i: (0, 0)),           # beta1 row
            pl.BlockSpec((3 * WCout, WCout), lambda i: (0, 0)),   # band2
            pl.BlockSpec((1, WCout), lambda i: (0, 0)),           # b2 row
            pl.BlockSpec((1, WCout), lambda i: (0, 0)),           # gamma2 row
            pl.BlockSpec((1, WCout), lambda i: (0, 0)),           # beta2 row
            pl.BlockSpec((WCout, WCout), lambda i: (0, 0)),       # channel fold
        ],
        out_specs=pl.BlockSpec((NH, WCout), lambda i: (0, 0)),
        out_shape=jax.ShapeDtypeStruct((NH, WCout), out_dtype),
        compiler_params=pltpu.CompilerParams(
            dimension_semantics=("arbitrary",)),
    )(x2d, prep["band1"], prep["b1"], prep["g1"], prep["be1"],
      prep["band2"], prep["b2"], prep["g2"], prep["be2"], prep["fold"])

    Cout = WCout // W
    out = out2d.astype(jnp.float32).reshape(N, H, W, Cout)
    return jnp.transpose(out, (0, 3, 1, 2))                       # back to NCHW


# ----------------------------------------------------------------------------
# Parameter init (mirrors the PyTorch module's shapes / defaults)
# ----------------------------------------------------------------------------
def init_conv_block_params(key, in_channels, out_channels):
    k1, k2, k3, k4 = jax.random.split(key, 4)
    fan1 = in_channels * 9
    fan2 = out_channels * 9
    return {
        # HWIO conv weights (PyTorch OIHW transposed) + biases.
        "w1": jax.random.uniform(k1, (3, 3, in_channels, out_channels),
                                 jnp.float32, -1.0, 1.0) / jnp.sqrt(fan1),
        "b1": jax.random.uniform(k2, (out_channels,),
                                 jnp.float32, -1.0, 1.0) / jnp.sqrt(fan1),
        "w2": jax.random.uniform(k3, (3, 3, out_channels, out_channels),
                                 jnp.float32, -1.0, 1.0) / jnp.sqrt(fan2),
        "b2": jax.random.uniform(k4, (out_channels,),
                                 jnp.float32, -1.0, 1.0) / jnp.sqrt(fan2),
        # BatchNorm affine params: PyTorch default init (weight=1, bias=0).
        "g1": jnp.ones((out_channels,), jnp.float32),
        "be1": jnp.zeros((out_channels,), jnp.float32),
        "g2": jnp.ones((out_channels,), jnp.float32),
        "be2": jnp.zeros((out_channels,), jnp.float32),
    }


# ----------------------------------------------------------------------------
# Pure-JAX f32 reference (correctness check only)
# ----------------------------------------------------------------------------
def _reference_forward(x_nchw, params, eps=1e-5):
    def conv(x, w_hwio, b):
        y = jax.lax.conv_general_dilated(
            x, w_hwio, window_strides=(1, 1), padding="SAME",
            dimension_numbers=("NHWC", "HWIO", "NHWC"))
        return y + b.reshape(1, 1, 1, -1)

    def bn_relu_(y, g, be):
        m = jnp.mean(y, axis=(0, 1, 2))
        v = jnp.mean(jnp.square(y - m), axis=(0, 1, 2))
        return jnp.maximum((y - m) / jnp.sqrt(v + eps) * g + be, 0.0)

    x = jnp.transpose(x_nchw, (0, 2, 3, 1))
    y = bn_relu_(conv(x, params["w1"], params["b1"]), params["g1"], params["be1"])
    y = bn_relu_(conv(y, params["w2"], params["b2"]), params["g2"], params["be2"])
    return jnp.transpose(y, (0, 3, 1, 2))


if __name__ == "__main__":
    in_channels, out_channels = 4, 8
    N, H, W = 2, 16, 16

    key = jax.random.PRNGKey(0)
    kx, kp = jax.random.split(key)
    x = jax.random.normal(kx, (N, in_channels, H, W), jnp.float32)
    params = init_conv_block_params(kp, in_channels, out_channels)

    # One-time precompute of bands / fold / affine rows (kept across calls).
    prep = prepare_conv_block_params(params, W)

    fwd = jax.jit(conv_block_forward)
    out = jax.block_until_ready(fwd(x, prep))

    ref = _reference_forward(x, params)
    assert out.shape == (N, out_channels, H, W), out.shape

    # bf16 MXU operands / bf16 intermediate vs an all-f32 reference -> loose
    # tolerance; BN is applied to the f32 accumulators so stats are consistent.
    max_err = float(jnp.max(jnp.abs(out - ref)))
    mean_err = float(jnp.mean(jnp.abs(out - ref)))
    assert jnp.allclose(out, ref, atol=5e-2, rtol=5e-2), (max_err, mean_err)
    assert mean_err < 1e-2, (max_err, mean_err)

    print("KERNEL_OK")
</pallas_src>

<mosaic_0001>
module attributes {stable_mosaic.version = 11 : i64} {
  func.func @_conv_block_kernel(%arg0: i32, %arg1: memref<32x64xbf16, #tpu.memory_space<vmem>>, %arg2: memref<192x128xbf16, #tpu.memory_space<vmem>>, %arg3: memref<1x128xf32, #tpu.memory_space<vmem>>, %arg4: memref<1x128xf32, #tpu.memory_space<vmem>>, %arg5: memref<1x128xf32, #tpu.memory_space<vmem>>, %arg6: memref<384x128xbf16, #tpu.memory_space<vmem>>, %arg7: memref<1x128xf32, #tpu.memory_space<vmem>>, %arg8: memref<1x128xf32, #tpu.memory_space<vmem>>, %arg9: memref<1x128xf32, #tpu.memory_space<vmem>>, %arg10: memref<128x128xf32, #tpu.memory_space<vmem>>, %arg11: memref<32x128xf32, #tpu.memory_space<vmem>>) attributes {dimension_semantics = [#tpu.dimension_semantics<arbitrary>], iteration_bounds = array<i64: 1>, scalar_prefetch = 0 : i64, scratch_operands = 0 : i64, tpu.core_type = #tpu.core_type<tc>, window_params = [{pipeline_mode = #tpu.pipeline_mode<synchronous>, transform_indices = @transform_0, window_bounds = array<i64: 32, 64>}, {pipeline_mode = #tpu.pipeline_mode<synchronous>, transform_indices = @transform_1, window_bounds = array<i64: 192, 128>}, {pipeline_mode = #tpu.pipeline_mode<synchronous>, transform_indices = @transform_2, window_bounds = array<i64: 1, 128>}, {pipeline_mode = #tpu.pipeline_mode<synchronous>, transform_indices = @transform_3, window_bounds = array<i64: 1, 128>}, {pipeline_mode = #tpu.pipeline_mode<synchronous>, transform_indices = @transform_4, window_bounds = array<i64: 1, 128>}, {pipeline_mode = #tpu.pipeline_mode<synchronous>, transform_indices = @transform_5, window_bounds = array<i64: 384, 128>}, {pipeline_mode = #tpu.pipeline_mode<synchronous>, transform_indices = @transform_6, window_bounds = array<i64: 1, 128>}, {pipeline_mode = #tpu.pipeline_mode<synchronous>, transform_indices = @transform_7, window_bounds = array<i64: 1, 128>}, {pipeline_mode = #tpu.pipeline_mode<synchronous>, transform_indices = @transform_8, window_bounds = array<i64: 1, 128>}, {pipeline_mode = #tpu.pipeline_mode<synchronous>, transform_indices = @transform_9, window_bounds = array<i64: 128, 128>}, {pipeline_mode = #tpu.pipeline_mode<synchronous>, transform_indices = @transform_10, window_bounds = array<i64: 32, 128>}]} {
    %c0 = arith.constant 0 : index
    %c0_0 = arith.constant 0 : index
    %0 = vector.load %arg10[%c0, %c0_0] : memref<128x128xf32, #tpu.memory_space<vmem>>, vector<128x128xf32>
    %1 = tpu.iota {dimensions = array<i32: 0>} : vector<32x1xi32>
    %c16_i32 = arith.constant 16 : i32
    %c0_i32 = arith.constant 0 : i32
    %2 = arith.cmpi eq, %c16_i32, %c0_i32 : i32
    %c1_i32 = arith.constant 1 : i32
    %3 = arith.select %2, %c1_i32, %c16_i32 : i32
    %4 = vector.broadcast %3 : i32 to vector<32x1xi32>
    %5 = arith.remsi %1, %4 : vector<32x1xi32>
    %c0_i32_1 = arith.constant 0 : i32
    %6 = vector.broadcast %c0_i32_1 : i32 to vector<32x1xi32>
    %7 = arith.cmpi ne, %5, %6 : vector<32x1xi32>
    %c0_i32_2 = arith.constant 0 : i32
    %8 = vector.broadcast %c0_i32_2 : i32 to vector<32x1xi32>
    %9 = arith.cmpi slt, %5, %8 : vector<32x1xi32>
    %c0_i32_3 = arith.constant 0 : i32
    %10 = arith.cmpi slt, %3, %c0_i32_3 : i32
    %11 = vector.broadcast %10 : i1 to vector<32x1xi1>
    %12 = vector.broadcast %11 : vector<32x1xi1> to vector<32x1xi1>
    %13 = arith.xori %9, %12 : vector<32x1xi1>
    %14 = arith.andi %13, %7 : vector<32x1xi1>
    %15 = vector.broadcast %3 : i32 to vector<32x1xi32>
    %16 = arith.addi %5, %15 : vector<32x1xi32>
    %17 = arith.select %14, %16, %5 : vector<32x1xi1>, vector<32x1xi32>
    %c1_i32_4 = arith.constant 1 : i32
    %18 = vector.broadcast %c1_i32_4 : i32 to vector<32x1xi32>
    %19 = arith.cmpi sge, %17, %18 : vector<32x1xi32>
    %c14_i32 = arith.constant 14 : i32
    %20 = vector.broadcast %c14_i32 : i32 to vector<32x1xi32>
    %21 = arith.cmpi sle, %17, %20 : vector<32x1xi32>
    %c0_5 = arith.constant 0 : index
    %c0_6 = arith.constant 0 : index
    %22 = vector.load %arg1[%c0_5, %c0_6] : memref<32x64xbf16, #tpu.memory_space<vmem>>, vector<32x64xbf16>
    %23 = arith.extf %22 : vector<32x64xbf16> to vector<32x64xf32>
    %c0_7 = arith.constant 0 : index
    %c0_8 = arith.constant 0 : index
    %24 = vector.load %arg3[%c0_7, %c0_8] : memref<1x128xf32, #tpu.memory_space<vmem>>, vector<1x128xf32>
    %c1_i32_9 = arith.constant 1 : i32
    %25 = tpu.dynamic_rotate %23 by %c1_i32_9 dim 0 : vector<32x64xf32>, i32 -> vector<32x64xf32>
    %cst = arith.constant 0.000000e+00 : f32
    %26 = vector.shape_cast %19 : vector<32x1xi1> to vector<32x1xi1>
    %27 = vector.broadcast %26 : vector<32x1xi1> to vector<32x64xi1>
    %28 = vector.broadcast %cst : f32 to vector<32x64xf32>
    %29 = arith.select %27, %25, %28 : vector<32x64xi1>, vector<32x64xf32>
    %c31_i32 = arith.constant 31 : i32
    %30 = tpu.dynamic_rotate %23 by %c31_i32 dim 0 : vector<32x64xf32>, i32 -> vector<32x64xf32>
    %cst_10 = arith.constant 0.000000e+00 : f32
    %31 = vector.shape_cast %21 : vector<32x1xi1> to vector<32x1xi1>
    %32 = vector.broadcast %31 : vector<32x1xi1> to vector<32x64xi1>
    %33 = vector.broadcast %cst_10 : f32 to vector<32x64xf32>
    %34 = arith.select %32, %30, %33 : vector<32x64xi1>, vector<32x64xf32>
    %35 = tpu.concatenate %29, %23, %34 in 1 : vector<32x64xf32>, vector<32x64xf32>, vector<32x64xf32> -> vector<32x192xf32>
    %36 = arith.truncf %35 : vector<32x192xf32> to vector<32x192xbf16>
    %c0_11 = arith.constant 0 : index
    %c0_12 = arith.constant 0 : index
    %37 = vector.load %arg2[%c0_11, %c0_12] : memref<192x128xbf16, #tpu.memory_space<vmem>>, vector<192x128xbf16>
    %cst_13 = arith.constant dense<0.000000e+00> : vector<32x128xf32>
    %38 = tpu.matmul %36, %37, %cst_13 {dimension_numbers = #tpu.dot_dimension_numbers<[1], [0], [0], [1], [0, 0, 1, 1], [], []>} : vector<32x192xbf16>, vector<192x128xbf16>, vector<32x128xf32> -> vector<32x128xf32>
    %39 = vector.broadcast %24 : vector<1x128xf32> to vector<32x128xf32>
    %40 = arith.addf %38, %39 : vector<32x128xf32>
    %c0_14 = arith.constant 0 : index
    %c0_15 = arith.constant 0 : index
    %41 = vector.load %arg4[%c0_14, %c0_15] : memref<1x128xf32, #tpu.memory_space<vmem>>, vector<1x128xf32>
    %c0_16 = arith.constant 0 : index
    %c0_17 = arith.constant 0 : index
    %42 = vector.load %arg5[%c0_16, %c0_17] : memref<1x128xf32, #tpu.memory_space<vmem>>, vector<1x128xf32>
    %cst_18 = arith.constant dense<0.000000e+00> : vector<128xf32>
    %43 = vector.multi_reduction <add>, %40, %cst_18 [0] : vector<32x128xf32> to vector<128xf32>
    %44 = vector.shape_cast %43 : vector<128xf32> to vector<1x128xf32>
    %cst_19 = arith.constant dense<0.000000e+00> : vector<1x128xf32>
    %45 = tpu.matmul %44, %0, %cst_19 {dimension_numbers = #tpu.dot_dimension_numbers<[1], [0], [0], [1], [0, 0, 1, 1], [], []>} : vector<1x128xf32>, vector<128x128xf32>, vector<1x128xf32> -> vector<1x128xf32>
    %cst_20 = arith.constant 0.001953125 : f32
    %46 = vector.broadcast %cst_20 : f32 to vector<1x128xf32>
    %47 = arith.mulf %45, %46 : vector<1x128xf32>
    %48 = vector.broadcast %47 : vector<1x128xf32> to vector<32x128xf32>
    %49 = arith.subf %40, %48 : vector<32x128xf32>
    %50 = arith.mulf %49, %49 : vector<32x128xf32>
    %cst_21 = arith.constant dense<0.000000e+00> : vector<128xf32>
    %51 = vector.multi_reduction <add>, %50, %cst_21 [0] : vector<32x128xf32> to vector<128xf32>
    %52 = vector.shape_cast %51 : vector<128xf32> to vector<1x128xf32>
    %cst_22 = arith.constant dense<0.000000e+00> : vector<1x128xf32>
    %53 = tpu.matmul %52, %0, %cst_22 {dimension_numbers = #tpu.dot_dimension_numbers<[1], [0], [0], [1], [0, 0, 1, 1], [], []>} : vector<1x128xf32>, vector<128x128xf32>, vector<1x128xf32> -> vector<1x128xf32>
    %cst_23 = arith.constant 0.001953125 : f32
    %54 = vector.broadcast %cst_23 : f32 to vector<1x128xf32>
    %55 = arith.mulf %53, %54 : vector<1x128xf32>
    %cst_24 = arith.constant 9.99999974E-6 : f32
    %56 = vector.broadcast %cst_24 : f32 to vector<1x128xf32>
    %57 = arith.addf %55, %56 : vector<1x128xf32>
    %58 = math.rsqrt %57 : vector<1x128xf32>
    %59 = arith.mulf %41, %58 : vector<1x128xf32>
    %60 = vector.broadcast %59 : vector<1x128xf32> to vector<32x128xf32>
    %61 = arith.mulf %49, %60 : vector<32x128xf32>
    %62 = vector.broadcast %42 : vector<1x128xf32> to vector<32x128xf32>
    %63 = arith.addf %61, %62 : vector<32x128xf32>
    %cst_25 = arith.constant 0.000000e+00 : f32
    %64 = vector.broadcast %cst_25 : f32 to vector<32x128xf32>
    %65 = arith.maximumf %63, %64 : vector<32x128xf32>
    %c0_26 = arith.constant 0 : index
    %c0_27 = arith.constant 0 : index
    %66 = vector.load %arg7[%c0_26, %c0_27] : memref<1x128xf32, #tpu.memory_space<vmem>>, vector<1x128xf32>
    %c1_i32_28 = arith.constant 1 : i32
    %67 = tpu.dynamic_rotate %65 by %c1_i32_28 dim 0 : vector<32x128xf32>, i32 -> vector<32x128xf32>
    %cst_29 = arith.constant 0.000000e+00 : f32
    %68 = vector.shape_cast %19 : vector<32x1xi1> to vector<32x1xi1>
    %69 = vector.broadcast %68 : vector<32x1xi1> to vector<32x128xi1>
    %70 = vector.broadcast %cst_29 : f32 to vector<32x128xf32>
    %71 = arith.select %69, %67, %70 : vector<32x128xi1>, vector<32x128xf32>
    %c31_i32_30 = arith.constant 31 : i32
    %72 = tpu.dynamic_rotate %65 by %c31_i32_30 dim 0 : vector<32x128xf32>, i32 -> vector<32x128xf32>
    %cst_31 = arith.constant 0.000000e+00 : f32
    %73 = vector.shape_cast %21 : vector<32x1xi1> to vector<32x1xi1>
    %74 = vector.broadcast %73 : vector<32x1xi1> to vector<32x128xi1>
    %75 = vector.broadcast %cst_31 : f32 to vector<32x128xf32>
    %76 = arith.select %74, %72, %75 : vector<32x128xi1>, vector<32x128xf32>
    %77 = tpu.concatenate %71, %65, %76 in 1 : vector<32x128xf32>, vector<32x128xf32>, vector<32x128xf32> -> vector<32x384xf32>
    %78 = arith.truncf %77 : vector<32x384xf32> to vector<32x384xbf16>
    %c0_32 = arith.constant 0 : index
    %c0_33 = arith.constant 0 : index
    %79 = vector.load %arg6[%c0_32, %c0_33] : memref<384x128xbf16, #tpu.memory_space<vmem>>, vector<384x128xbf16>
    %cst_34 = arith.constant dense<0.000000e+00> : vector<32x128xf32>
    %80 = tpu.matmul %78, %79, %cst_34 {dimension_numbers = #tpu.dot_dimension_numbers<[1], [0], [0], [1], [0, 0, 1, 1], [], []>} : vector<32x384xbf16>, vector<384x128xbf16>, vector<32x128xf32> -> vector<32x128xf32>
    %81 = vector.broadcast %66 : vector<1x128xf32> to vector<32x128xf32>
    %82 = arith.addf %80, %81 : vector<32x128xf32>
    %c0_35 = arith.constant 0 : index
    %c0_36 = arith.constant 0 : index
    %83 = vector.load %arg8[%c0_35, %c0_36] : memref<1x128xf32, #tpu.memory_space<vmem>>, vector<1x128xf32>
    %c0_37 = arith.constant 0 : index
    %c0_38 = arith.constant 0 : index
    %84 = vector.load %arg9[%c0_37, %c0_38] : memref<1x128xf32, #tpu.memory_space<vmem>>, vector<1x128xf32>
    %cst_39 = arith.constant dense<0.000000e+00> : vector<128xf32>
    %85 = vector.multi_reduction <add>, %82, %cst_39 [0] : vector<32x128xf32> to vector<128xf32>
    %86 = vector.shape_cast %85 : vector<128xf32> to vector<1x128xf32>
    %cst_40 = arith.constant dense<0.000000e+00> : vector<1x128xf32>
    %87 = tpu.matmul %86, %0, %cst_40 {dimension_numbers = #tpu.dot_dimension_numbers<[1], [0], [0], [1], [0, 0, 1, 1], [], []>} : vector<1x128xf32>, vector<128x128xf32>, vector<1x128xf32> -> vector<1x128xf32>
    %cst_41 = arith.constant 0.001953125 : f32
    %88 = vector.broadcast %cst_41 : f32 to vector<1x128xf32>
    %89 = arith.mulf %87, %88 : vector<1x128xf32>
    %90 = vector.broadcast %89 : vector<1x128xf32> to vector<32x128xf32>
    %91 = arith.subf %82, %90 : vector<32x128xf32>
    %92 = arith.mulf %91, %91 : vector<32x128xf32>
    %cst_42 = arith.constant dense<0.000000e+00> : vector<128xf32>
    %93 = vector.multi_reduction <add>, %92, %cst_42 [0] : vector<32x128xf32> to vector<128xf32>
    %94 = vector.shape_cast %93 : vector<128xf32> to vector<1x128xf32>
    %cst_43 = arith.constant dense<0.000000e+00> : vector<1x128xf32>
    %95 = tpu.matmul %94, %0, %cst_43 {dimension_numbers = #tpu.dot_dimension_numbers<[1], [0], [0], [1], [0, 0, 1, 1], [], []>} : vector<1x128xf32>, vector<128x128xf32>, vector<1x128xf32> -> vector<1x128xf32>
    %cst_44 = arith.constant 0.001953125 : f32
    %96 = vector.broadcast %cst_44 : f32 to vector<1x128xf32>
    %97 = arith.mulf %95, %96 : vector<1x128xf32>
    %cst_45 = arith.constant 9.99999974E-6 : f32
    %98 = vector.broadcast %cst_45 : f32 to vector<1x128xf32>
    %99 = arith.addf %97, %98 : vector<1x128xf32>
    %100 = math.rsqrt %99 : vector<1x128xf32>
    %101 = arith.mulf %83, %100 : vector<1x128xf32>
    %102 = vector.broadcast %101 : vector<1x128xf32> to vector<32x128xf32>
    %103 = arith.mulf %91, %102 : vector<32x128xf32>
    %104 = vector.broadcast %84 : vector<1x128xf32> to vector<32x128xf32>
    %105 = arith.addf %103, %104 : vector<32x128xf32>
    %cst_46 = arith.constant 0.000000e+00 : f32
    %106 = vector.broadcast %cst_46 : f32 to vector<32x128xf32>
    %107 = arith.maximumf %105, %106 : vector<32x128xf32>
    %c0_47 = arith.constant 0 : index
    %c0_48 = arith.constant 0 : index
    %108 = vector.load %arg11[%c0_47, %c0_48] : memref<32x128xf32, #tpu.memory_space<vmem>>, vector<32x128xf32>
    tpu.vector_store %arg11[%c0_47, %c0_48], %107 {strides = array<i32>} : memref<32x128xf32, #tpu.memory_space<vmem>>, vector<32x128xf32>,
    return
  }
  func.func @transform_0(%arg0: i32) -> (i32, i32) {
    %c0_i32 = arith.constant 0 : i32
    %c0_i32_0 = arith.constant 0 : i32
    %c0_i32_1 = arith.constant 0 : i32
    return %c0_i32, %c0_i32_0 : i32, i32
  }
  func.func @transform_1(%arg0: i32) -> (i32, i32) {
    %c0_i32 = arith.constant 0 : i32
    %c0_i32_0 = arith.constant 0 : i32
    %c0_i32_1 = arith.constant 0 : i32
    return %c0_i32, %c0_i32_0 : i32, i32
  }
  func.func @transform_2(%arg0: i32) -> (i32, i32) {
    %c0_i32 = arith.constant 0 : i32
    %c0_i32_0 = arith.constant 0 : i32
    %c0_i32_1 = arith.constant 0 : i32
    return %c0_i32, %c0_i32_0 : i32, i32
  }
  func.func @transform_3(%arg0: i32) -> (i32, i32) {
    %c0_i32 = arith.constant 0 : i32
    %c0_i32_0 = arith.constant 0 : i32
    %c0_i32_1 = arith.constant 0 : i32
    return %c0_i32, %c0_i32_0 : i32, i32
  }
  func.func @transform_4(%arg0: i32) -> (i32, i32) {
    %c0_i32 = arith.constant 0 : i32
    %c0_i32_0 = arith.constant 0 : i32
    %c0_i32_1 = arith.constant 0 : i32
    return %c0_i32, %c0_i32_0 : i32, i32
  }
  func.func @transform_5(%arg0: i32) -> (i32, i32) {
    %c0_i32 = arith.constant 0 : i32
    %c0_i32_0 = arith.constant 0 : i32
    %c0_i32_1 = arith.constant 0 : i32
    return %c0_i32, %c0_i32_0 : i32, i32
  }
  func.func @transform_6(%arg0: i32) -> (i32, i32) {
    %c0_i32 = arith.constant 0 : i32
    %c0_i32_0 = arith.constant 0 : i32
    %c0_i32_1 = arith.constant 0 : i32
    return %c0_i32, %c0_i32_0 : i32, i32
  }
  func.func @transform_7(%arg0: i32) -> (i32, i32) {
    %c0_i32 = arith.constant 0 : i32
    %c0_i32_0 = arith.constant 0 : i32
    %c0_i32_1 = arith.constant 0 : i32
    return %c0_i32, %c0_i32_0 : i32, i32
  }
  func.func @transform_8(%arg0: i32) -> (i32, i32) {
    %c0_i32 = arith.constant 0 : i32
    %c0_i32_0 = arith.constant 0 : i32
    %c0_i32_1 = arith.constant 0 : i32
    return %c0_i32, %c0_i32_0 : i32, i32
  }
  func.func @transform_9(%arg0: i32) -> (i32, i32) {
    %c0_i32 = arith.constant 0 : i32
    %c0_i32_0 = arith.constant 0 : i32
    %c0_i32_1 = arith.constant 0 : i32
    return %c0_i32, %c0_i32_0 : i32, i32
  }
  func.func @transform_10(%arg0: i32) -> (i32, i32) {
    %c0_i32 = arith.constant 0 : i32
    %c0_i32_0 = arith.constant 0 : i32
    %c0_i32_1 = arith.constant 0 : i32
    return %c0_i32, %c0_i32_0 : i32, i32
  }
}

</mosaic_0001>

<llo_original>
// kernel: conv_block_forward.1
$region0: #{conv_block_forward.1}
  #allocation0 [shape = 'u32[]', space=smem, size = 0x4, offset = 0x4, fixed_abs, tag = 'smem constant byte address 0x4 - core index']
  #allocation1 [shape = 'u32[144,128]{1,0:T(1,128)}', space=vmem, size = 0x12000, scoped, tag = 'internal scratch']
  %s0 = inlined_call_operand.vmem [shape: bf16[32,64], index: 0, kind: input, shape index: {}]
  %s1 = inlined_call_operand.vmem [shape: bf16[192,128], index: 1, kind: input, shape index: {}]
  %s2 = inlined_call_operand.vmem [shape: f32[1,128], index: 2, kind: input, shape index: {}]
  %s3 = inlined_call_operand.vmem [shape: f32[1,128], index: 3, kind: input, shape index: {}]
  %s4 = inlined_call_operand.vmem [shape: f32[1,128], index: 4, kind: input, shape index: {}]
  %s5 = inlined_call_operand.vmem [shape: bf16[384,128], index: 5, kind: input, shape index: {}]
  %s6 = inlined_call_operand.vmem [shape: f32[1,128], index: 6, kind: input, shape index: {}]
  %s7 = inlined_call_operand.vmem [shape: f32[1,128], index: 7, kind: input, shape index: {}]
  %s8 = inlined_call_operand.vmem [shape: f32[1,128], index: 8, kind: input, shape index: {}]
  %s9 = inlined_call_operand.vmem [shape: f32[128,128], index: 9, kind: input, shape index: {}]
  %s10 = inlined_call_operand.vmem [shape: f32[32,128], index: 10, kind: output, shape index: {}]
  %s11 = sld [smem:[#allocation0]]
  $region50: #{conv_block_forward.1} parent=0
    _
  %s13 = ssub.s32 1, %s11
  %s14 = scalar_select 0, %s13, %s11
  // Predicated region
  $region2: #{conv_block_forward.1} parent=0 // pred_check
    _
  $region3: #{conv_block_forward.1} parent=0 // pred_check_branch
    %16 = sbr.rel (0) target = $region5
  $region4: #{conv_block_forward.1} parent=0 // pred_region
    _
  $region5: #{conv_block_forward.1} parent=0 // pred_fallthru
    _
  // Predicated region
  $region6: #{conv_block_forward.1} parent=0 // pred_check
    _
  $region7: #{conv_block_forward.1} parent=0 // pred_check_branch
    %18 = sbr.rel (0) target = $region9
  $region8: #{conv_block_forward.1} parent=0 // pred_region
    _
  $region9: #{conv_block_forward.1} parent=0 // pred_fallthru
    _
  // Predicated region
  $region10: #{conv_block_forward.1} parent=0 // pred_check
    _
  $region11: #{conv_block_forward.1} parent=0 // pred_check_branch
    %20 = sbr.rel (0) target = $region13
  $region12: #{conv_block_forward.1} parent=0 // pred_region
    _
  $region13: #{conv_block_forward.1} parent=0 // pred_fallthru
    _
  // Predicated region
  $region14: #{conv_block_forward.1} parent=0 // pred_check
    _
  $region15: #{conv_block_forward.1} parent=0 // pred_check_branch
    %22 = sbr.rel (0) target = $region17
  $region16: #{conv_block_forward.1} parent=0 // pred_region
    _
  $region17: #{conv_block_forward.1} parent=0 // pred_fallthru
    _
  // Predicated region
  $region18: #{conv_block_forward.1} parent=0 // pred_check
    _
  $region19: #{conv_block_forward.1} parent=0 // pred_check_branch
    %24 = sbr.rel (0) target = $region21
  $region20: #{conv_block_forward.1} parent=0 // pred_region
    _
  $region21: #{conv_block_forward.1} parent=0 // pred_fallthru
    _
  // Predicated region
  $region22: #{conv_block_forward.1} parent=0 // pred_check
    _
  $region23: #{conv_block_forward.1} parent=0 // pred_check_branch
    %26 = sbr.rel (0) target = $region25
  $region24: #{conv_block_forward.1} parent=0 // pred_region
    _
  $region25: #{conv_block_forward.1} parent=0 // pred_fallthru
    _
  // Predicated region
  $region26: #{conv_block_forward.1} parent=0 // pred_check
    _
  $region27: #{conv_block_forward.1} parent=0 // pred_check_branch
    %28 = sbr.rel (0) target = $region29
  $region28: #{conv_block_forward.1} parent=0 // pred_region
    _
  $region29: #{conv_block_forward.1} parent=0 // pred_fallthru
    _
  // Predicated region
  $region30: #{conv_block_forward.1} parent=0 // pred_check
    _
  $region31: #{conv_block_forward.1} parent=0 // pred_check_branch
    %30 = sbr.rel (0) target = $region33
  $region32: #{conv_block_forward.1} parent=0 // pred_region
    _
  $region33: #{conv_block_forward.1} parent=0 // pred_fallthru
    _
  // Predicated region
  $region34: #{conv_block_forward.1} parent=0 // pred_check
    _
  $region35: #{conv_block_forward.1} parent=0 // pred_check_branch
    %32 = sbr.rel (0) target = $region37
  $region36: #{conv_block_forward.1} parent=0 // pred_region
    _
  $region37: #{conv_block_forward.1} parent=0 // pred_fallthru
    _
  // Predicated region
  $region38: #{conv_block_forward.1} parent=0 // pred_check
    _
  $region39: #{conv_block_forward.1} parent=0 // pred_check_branch
    %34 = sbr.rel (0) target = $region41
  $region40: #{conv_block_forward.1} parent=0 // pred_region
    _
  $region41: #{conv_block_forward.1} parent=0 // pred_fallthru
    _
  %v36 = vld [vmem:[%s9] sm:$0xff]
  %v37 = vld [vmem:[%s9 + $0x8] sm:$0xff]
  %v38 = vld [vmem:[%s9 + $0x10] sm:$0xff]
  %v39 = vld [vmem:[%s9 + $0x18] sm:$0xff]
  %v40 = vld [vmem:[%s9 + $0x20] sm:$0xff]
  %v41 = vld [vmem:[%s9 + $0x28] sm:$0xff]
  %v42 = vld [vmem:[%s9 + $0x30] sm:$0xff]
  %v43 = vld [vmem:[%s9 + $0x38] sm:$0xff]
  %v44 = vld [vmem:[%s9 + $0x40] sm:$0xff]
  %v45 = vld [vmem:[%s9 + $0x48] sm:$0xff]
  %v46 = vld [vmem:[%s9 + $0x50] sm:$0xff]
  %v47 = vld [vmem:[%s9 + $0x58] sm:$0xff]
  %v48 = vld [vmem:[%s9 + $0x60] sm:$0xff]
  %v49 = vld [vmem:[%s9 + $0x68] sm:$0xff]
  %v50 = vld [vmem:[%s9 + $0x70] sm:$0xff]
  %v51 = vld [vmem:[%s9 + $0x78] sm:$0xff]
  %v52 = vlaneseq
  %v53 = vshrl.u32 %v52, 7
  %v54 = vadd.s32 %v53, 8
  %v55 = vadd.s32 %v53, 16
  %v56 = vadd.s32 %v53, 24
  %vm57 = vcmp.lt.s32.totalorder %v53, 0
  %v58 = vsub.s32 0, %v53
  %v59 = vsel %vm57, %v58, %v53
  %v60 = vshrl.u32 %v59, 4
  %v61 = vand.u32 %v59, 15
  %v62 = vsub.s32 0, %v61
  %v63 = vsel %vm57, %v62, %v61
  %vm64 = vcmp.lt.s32.totalorder %v54, 0
  %v65 = vsub.s32 0, %v54
  %v66 = vsel %vm64, %v65, %v54
  %v67 = vshrl.u32 %v66, 4
  %v68 = vand.u32 %v66, 15
  %v69 = vsub.s32 0, %v68
  %v70 = vsel %vm64, %v69, %v68
  %vm71 = vcmp.lt.s32.totalorder %v55, 0
  %v72 = vsub.s32 0, %v55
  %v73 = vsel %vm71, %v72, %v55
  %v74 = vshrl.u32 %v73, 4
  %v75 = vand.u32 %v73, 15
  %v76 = vsub.s32 0, %v75
  %v77 = vsel %vm71, %v76, %v75
  %vm78 = vcmp.lt.s32.totalorder %v56, 0
  %v79 = vsub.s32 0, %v56
  %v80 = vsel %vm78, %v79, %v56
  %v81 = vshrl.u32 %v80, 4
  %v82 = vand.u32 %v80, 15
  %v83 = vsub.s32 0, %v82
  %v84 = vsel %vm78, %v83, %v82
  %vm85 = vcmp.ne.s32.totalorder %v63, 0
  %vm86 = vcmp.ne.s32.totalorder %v70, 0
  %vm87 = vcmp.ne.s32.totalorder %v77, 0
  %vm88 = vcmp.ne.s32.totalorder %v84, 0
  %vm89 = vcmp.lt.s32.totalorder %v63, 0
  %vm90 = vcmp.lt.s32.totalorder %v70, 0
  %vm91 = vcmp.lt.s32.totalorder %v77, 0
  %vm92 = vcmp.lt.s32.totalorder %v84, 0
  %vm93 = vmand %vm89, %vm85
  %vm94 = vmand %vm90, %vm86
  %vm95 = vmand %vm91, %vm87
  %vm96 = vmand %vm92, %vm88
  %v97 = vadd.s32 %v63, 16
  %v98 = vadd.s32 %v70, 16
  %v99 = vadd.s32 %v77, 16
  %v100 = vadd.s32 %v84, 16
  %v101 = vsel %vm93, %v97, %v63
  %v102 = vsel %vm94, %v98, %v70
  %v103 = vsel %vm95, %v99, %v77
  %v104 = vsel %vm96, %v100, %v84
  %vm105 = vcmp.ge.s32.totalorder %v101, 1
  %vm106 = vcmp.ge.s32.totalorder %v102, 1
  %vm107 = vcmp.ge.s32.totalorder %v103, 1
  %vm108 = vcmp.ge.s32.totalorder %v104, 1
  %vm109 = vcmp.le.s32.totalorder %v101, 14
  %vm110 = vcmp.le.s32.totalorder %v102, 14
  %vm111 = vcmp.le.s32.totalorder %v103, 14
  %vm112 = vcmp.le.s32.totalorder %v104, 14
  %v113 = vld [vmem:[%s0] sm:$0xf]
  %v114 = vld [vmem:[%s0 + $0x4] sm:$0xf]
  %v115 = vld [vmem:[%s0 + $0x8] sm:$0xf]
  %v116 = vld [vmem:[%s0 + $0xc] sm:$0xf]
  %v117 = vunpack.c.l.bf16 %v113
  %v118 = vunpack.c.l.bf16 %v114
  %v119 = vunpack.c.l.bf16 %v115
  %v120 = vunpack.c.l.bf16 %v116
  %v121 = vld [vmem:[%s2] sm:$0x1]
  %v122 = vrot.slane %v117, 7
  %v123 = vrot.slane %v118, 7
  %v124 = vrot.slane %v119, 7
  %v125 = vrot.slane %v120, 7
  %vm126 = vcmp.lt.s32.totalorder %v53, 1
  %v127 = vsel %vm126, %v124, %v125
  %v128 = vsel %vm126, %v123, %v124
  %v129 = vsel %vm126, %v122, %v123
  %v130 = vsel %vm126, %v125, %v122
  %v131 = vsel %vm105, 1, 0
  %v132 = vsel %vm106, 1, 0
  %v133 = vsel %vm107, 1, 0
  %v134 = vsel %vm108, 1, 0
  %vm135 = vcmp.eq.s32.totalorder %v131, 1
  %vm136 = vcmp.eq.s32.totalorder %v132, 1
  %vm137 = vcmp.eq.s32.totalorder %v133, 1
  %vm138 = vcmp.eq.s32.totalorder %v134, 1
  %v139 = vsel %vm135, %v130, 0.0
  %v140 = vsel %vm136, %v129, 0.0
  %v141 = vsel %vm137, %v128, 0.0
  %v142 = vsel %vm138, %v127, 0.0
  %v143 = vrot.slane %v117, 1
  %v144 = vrot.slane %v118, 1
  %v145 = vrot.slane %v119, 1
  %v146 = vrot.slane %v120, 1
  %vm147 = vcmp.lt.s32.totalorder %v53, 7
  %v148 = vsel %vm147, %v145, %v146
  %v149 = vsel %vm147, %v144, %v145
  %v150 = vsel %vm147, %v143, %v144
  %v151 = vsel %vm147, %v146, %v143
  %v152 = vsel %vm109, 1, 0
  %v153 = vsel %vm110, 1, 0
  %v154 = vsel %vm111, 1, 0
  %v155 = vsel %vm112, 1, 0
  %vm156 = vcmp.eq.s32.totalorder %v152, 1
  %vm157 = vcmp.eq.s32.totalorder %v153, 1
  %vm158 = vcmp.eq.s32.totalorder %v154, 1
  %vm159 = vcmp.eq.s32.totalorder %v155, 1
  %v160 = vsel %vm156, %v150, 0.0
  %v161 = vsel %vm157, %v149, 0.0
  %v162 = vsel %vm158, %v148, 0.0
  %v163 = vsel %vm159, %v151, 0.0
  %168 = vrot.lane.b32.xlu0 %v117, 64
  %v169 = vpop.permute.xlu0 %168
  %170 = vrot.lane.b32.xlu0 %v118, 64
  %v171 = vpop.permute.xlu0 %170
  %172 = vrot.lane.b32.xlu0 %v119, 64
  %v173 = vpop.permute.xlu0 %172
  %174 = vrot.lane.b32.xlu0 %v120, 64
  %v175 = vpop.permute.xlu0 %174
  %vm180 = vcmask 523264
  %v181 = vsel %vm180, %v139, %v169
  %v182 = vsel %vm180, %v140, %v171
  %v183 = vsel %vm180, %v141, %v173
  %v184 = vsel %vm180, %v142, %v175
  %v185 = vpack.c.bf16 %v182, %v181
  %v186 = vpack.c.bf16 %v161, %v160
  %v187 = vpack.c.bf16 %v184, %v183
  %v188 = vpack.c.bf16 %v163, %v162
  %v189 = vld [vmem:[%s1] sm:$0xf]
  %v190 = vld [vmem:[%s1 + $0x4] sm:$0xf]
  %v191 = vld [vmem:[%s1 + $0x8] sm:$0xf]
  %v192 = vld [vmem:[%s1 + $0xc] sm:$0xf]
  %v193 = vld [vmem:[%s1 + $0x10] sm:$0xf]
  %v194 = vld [vmem:[%s1 + $0x14] sm:$0xf]
  %v195 = vld [vmem:[%s1 + $0x18] sm:$0xf]
  %v196 = vld [vmem:[%s1 + $0x1c] sm:$0xf]
  %v197 = vld [vmem:[%s1 + $0x20] sm:$0xf]
  %v198 = vld [vmem:[%s1 + $0x24] sm:$0xf]
  %v199 = vld [vmem:[%s1 + $0x28] sm:$0xf]
  %v200 = vld [vmem:[%s1 + $0x2c] sm:$0xf]
  %v201 = vld [vmem:[%s1 + $0x30] sm:$0xf]
  %v202 = vld [vmem:[%s1 + $0x34] sm:$0xf]
  %v203 = vld [vmem:[%s1 + $0x38] sm:$0xf]
  %v204 = vld [vmem:[%s1 + $0x3c] sm:$0xf]
  %v205 = vld [vmem:[%s1 + $0x40] sm:$0xf]
  %v206 = vld [vmem:[%s1 + $0x44] sm:$0xf]
  %v207 = vld [vmem:[%s1 + $0x48] sm:$0xf]
  %v208 = vld [vmem:[%s1 + $0x4c] sm:$0xf]
  %v209 = vld [vmem:[%s1 + $0x50] sm:$0xf]
  %v210 = vld [vmem:[%s1 + $0x54] sm:$0xf]
  %v211 = vld [vmem:[%s1 + $0x58] sm:$0xf]
  %v212 = vld [vmem:[%s1 + $0x5c] sm:$0xf]
  %v214 = vlaneseq
  %v215 = vshrl.u32 %v214, 7
  %v216 = vsub.s32 0, %v215
  %v217 = vrot.slane %v121, %v216
  %v243 = vunpack.c.l.b16 %v189
  %v244 = vunpack.c.l.b16 %v190
  %v245 = vunpack.c.l.b16 %v191
  %v246 = vunpack.c.l.b16 %v192
  %v247 = vunpack.c.l.b16 %v193
  %v248 = vunpack.c.l.b16 %v194
  %v249 = vunpack.c.l.b16 %v195
  %v250 = vunpack.c.l.b16 %v196
  %v251 = vunpack.c.l.b16 %v197
  %v252 = vunpack.c.l.b16 %v198
  %v253 = vunpack.c.l.b16 %v199
  %v254 = vunpack.c.l.b16 %v200
  %v255 = vunpack.c.l.b16 %v201
  %v256 = vunpack.c.l.b16 %v202
  %v257 = vunpack.c.l.b16 %v203
  %v258 = vunpack.c.l.b16 %v204
  %v259 = vunpack.c.l.b16 %v205
  %v260 = vunpack.c.l.b16 %v206
  %v261 = vunpack.c.l.b16 %v207
  %v262 = vunpack.c.l.b16 %v208
  %v263 = vunpack.c.l.b16 %v209
  %v264 = vunpack.c.l.b16 %v210
  %v265 = vunpack.c.l.b16 %v211
  %v266 = vunpack.c.l.b16 %v212
  %v267 = vpack.c.b16 %v244, %v243
  %v268 = vpack.c.b16 %v246, %v245
  %v269 = vpack.c.b16 %v248, %v247
  %v270 = vpack.c.b16 %v250, %v249
  %v271 = vpack.c.b16 %v252, %v251
  %v272 = vpack.c.b16 %v254, %v253
  %v273 = vpack.c.b16 %v256, %v255
  %v274 = vpack.c.b16 %v258, %v257
  %v275 = vpack.c.b16 %v260, %v259
  %v276 = vpack.c.b16 %v262, %v261
  %v277 = vpack.c.b16 %v264, %v263
  %v278 = vpack.c.b16 %v266, %v265
  %v292 = vsel %vm180, %v186, 0
  %v295 = vsel %vm180, %v188, 0
  %297 = vmatprep.subr.bf16.mxu0 0
  %298 = vmatpush1.bf16.msra.mxu0 %v267
  %299 = vmatprep.subr.bf16.mxu0 0
  %300 = vmatpush1.bf16.msra.mxu0 %v268
  %301 = vmatprep.subr.bf16.mxu0 0
  %302 = vmatpush1.bf16.msra.mxu0 %v269
  %303 = vmatprep.subr.bf16.mxu0 0
  %304 = vmatpush1.bf16.msra.mxu0 %v270
  %305 = vmatprep.subr.bf16.mxu0 0
  %306 = vmatpush1.bf16.msra.mxu0 %v271
  %307 = vmatprep.subr.bf16.mxu0 0
  %308 = vmatpush1.bf16.msra.mxu0 %v272
  %309 = vmatprep.subr.bf16.mxu0 0
  %310 = vmatpush1.bf16.msra.mxu0 %v273
  %311 = vmatprep.subr.bf16.mxu0 0
  %312 = vmatpush1.bf16.msra.mxu0 %v274
  %313 = vmatprep.subr.bf16.mxu0 0
  %314 = vmatpush1.bf16.msra.mxu0 %v275
  %315 = vmatprep.subr.bf16.mxu0 0
  %316 = vmatpush1.bf16.msra.mxu0 %v276
  %317 = vmatprep.subr.bf16.mxu0 0
  %318 = vmatpush1.bf16.msra.mxu0 %v277
  %319 = vmatprep.subr.bf16.mxu0 0
  %320 = vmatpush1.bf16.msra.mxu0 %v278
  %321 = vmatprep.subr.bf16.mxu0 0
  %322 = vmatpush1.bf16.msra.mxu0 0
  %323 = vmatprep.subr.bf16.mxu0 0
  %324 = vmatpush1.bf16.msra.mxu0 0
  %325 = vmatprep.subr.bf16.mxu0 0
  %326 = vmatpush1.bf16.msra.mxu0 0
  %327 = vmatprep.subr.bf16.mxu0 0
  %328 = vmatpush1.bf16.msra.mxu0 0
  %329 = vmatprep.mubr.bf16.mxu0 %v292
  %330 = vmatmul.mubr.bf16.gmra.mrb[0].mxu0 %v185
  %v331 = vpop.f32.mrb[0].mxu0
  %v332 = vadd.f32 %v217, %v331
  %v333 = vpop.f32.mrb[0].mxu0
  %v334 = vpop.f32.mrb[0].mxu0
  %v335 = vadd.f32 %v217, %v334
  %v336 = vpop.f32.mrb[0].mxu0
  %337 = vmatprep.mubr.bf16.mxu0 %v295
  %338 = vmatmul.mubr.bf16.gmra.mrb[0].mxu0 %v187
  %v339 = vpop.f32.mrb[0].mxu0
  %v340 = vadd.f32 %v217, %v339
  %v341 = vpop.f32.mrb[0].mxu0
  %v342 = vpop.f32.mrb[0].mxu0
  %v343 = vadd.f32 %v217, %v342
  %v344 = vpop.f32.mrb[0].mxu0
  %345 = vdwg.mxu0
  %v346 = vld [vmem:[%s3] sm:$0x1]
  %v347 = vld [vmem:[%s4] sm:$0x1]
  %v348 = vadd.f32 %v332, %v335
  %v349 = vadd.f32 %v348, %v340
  %v350 = vadd.f32 %v349, %v343
  %v351 = vrot.slane %v350, 4
  %v352 = vadd.f32 %v350, %v351
  %v353 = vrot.slane %v352, 2
  %v354 = vadd.f32 %v352, %v353
  %v355 = vrot.slane %v354, 1
  %v356 = vadd.f32 %v354, %v355
  %357 = vmatprep.subr.mxu0 0.0
  %358 = vmatpush1.msra.mxu0 %v36
  %359 = vmatprep.subr.mxu0 0.0
  %360 = vmatpush1.msra.mxu0 %v37
  %361 = vmatprep.subr.mxu0 0.0
  %362 = vmatpush1.msra.mxu0 %v38
  %363 = vmatprep.subr.mxu0 0.0
  %364 = vmatpush1.msra.mxu0 %v39
  %365 = vmatprep.subr.mxu0 0.0
  %366 = vmatpush1.msra.mxu0 %v40
  %367 = vmatprep.subr.mxu0 0.0
  %368 = vmatpush1.msra.mxu0 %v41
  %369 = vmatprep.subr.mxu0 0.0
  %370 = vmatpush1.msra.mxu0 %v42
  %371 = vmatprep.subr.mxu0 0.0
  %372 = vmatpush1.msra.mxu0 %v43
  %373 = vmatprep.subr.mxu0 0.0
  %374 = vmatpush1.msra.mxu0 %v44
  %375 = vmatprep.subr.mxu0 0.0
  %376 = vmatpush1.msra.mxu0 %v45
  %377 = vmatprep.subr.mxu0 0.0
  %378 = vmatpush1.msra.mxu0 %v46
  %379 = vmatprep.subr.mxu0 0.0
  %380 = vmatpush1.msra.mxu0 %v47
  %381 = vmatprep.subr.mxu0 0.0
  %382 = vmatpush1.msra.mxu0 %v48
  %383 = vmatprep.subr.mxu0 0.0
  %384 = vmatpush1.msra.mxu0 %v49
  %385 = vmatprep.subr.mxu0 0.0
  %386 = vmatpush1.msra.mxu0 %v50
  %387 = vmatprep.subr.mxu0 0.0
  %388 = vmatpush1.msra.mxu0 %v51
  %389 = vmatprep.subr.mxu0 0.0
  %390 = vmatpush1.msra.mxu0 0.0
  %391 = vmatprep.subr.mxu0 0.0
  %392 = vmatpush1.msra.mxu0 0.0
  %393 = vmatprep.subr.mxu0 0.0
  %394 = vmatpush1.msra.mxu0 0.0
  %395 = vmatprep.subr.mxu0 0.0
  %396 = vmatpush1.msra.mxu0 0.0
  %397 = vmatprep.subr.mxu0 0.0
  %398 = vmatpush1.msra.mxu0 0.0
  %399 = vmatprep.subr.mxu0 0.0
  %400 = vmatpush1.msra.mxu0 0.0
  %401 = vmatprep.subr.mxu0 0.0
  %402 = vmatpush1.msra.mxu0 0.0
  %403 = vmatprep.subr.mxu0 0.0
  %404 = vmatpush1.msra.mxu0 0.0
  %405 = vmatprep.subr.mxu0 0.0
  %406 = vmatpush1.msra.mxu0 0.0
  %407 = vmatprep.subr.mxu0 0.0
  %408 = vmatpush1.msra.mxu0 0.0
  %409 = vmatprep.subr.mxu0 0.0
  %410 = vmatpush1.msra.mxu0 0.0
  %411 = vmatprep.subr.mxu0 0.0
  %412 = vmatpush1.msra.mxu0 0.0
  %413 = vmatprep.subr.mxu0 0.0
  %414 = vmatpush1.msra.mxu0 0.0
  %415 = vmatprep.subr.mxu0 0.0
  %416 = vmatpush1.msra.mxu0 0.0
  %417 = vmatprep.subr.mxu0 0.0
  %418 = vmatpush1.msra.mxu0 0.0
  %419 = vmatprep.subr.mxu0 0.0
  %420 = vmatpush1.msra.mxu0 0.0
  %421 = vmatprep.mubr.f32.mxu0 0.0
  %422 = vmatmul.mubr.f32.gmra.mrb[0].mxu0 %v356
  %v423 = vpop.f32.mrb[0].mxu0
  %v424 = vadd.f32 0.0, %v423
  %v425 = vpop.f32.mrb[0].mxu0
  %426 = vdwg.mxu0
  %v427 = vmul.f32 %v424, 0.001953125
  %v428 = vlaneseq
  %v429 = vshrl.u32 %v428, 7
  %v430 = vsub.s32 0, %v429
  %v431 = vrot.slane %v427, %v430
  %v432 = vsub.f32 %v332, %v431
  %v433 = vsub.f32 %v335, %v431
  %v434 = vsub.f32 %v340, %v431
  %v435 = vsub.f32 %v343, %v431
  %v436 = vmul.f32 %v432, %v432
  %v437 = vmul.f32 %v433, %v433
  %v438 = vmul.f32 %v434, %v434
  %v439 = vmul.f32 %v435, %v435
  %v440 = vadd.f32 %v436, %v437
  %v441 = vadd.f32 %v440, %v438
  %v442 = vadd.f32 %v441, %v439
  %v443 = vrot.slane %v442, 4
  %v444 = vadd.f32 %v442, %v443
  %v445 = vrot.slane %v444, 2
  %v446 = vadd.f32 %v444, %v445
  %v447 = vrot.slane %v446, 1
  %v448 = vadd.f32 %v446, %v447
  %449 = vmatprep.subr.mxu0 0.0
  %450 = vmatpush1.msra.mxu0 %v36
  %451 = vmatprep.subr.mxu0 0.0
  %452 = vmatpush1.msra.mxu0 %v37
  %453 = vmatprep.subr.mxu0 0.0
  %454 = vmatpush1.msra.mxu0 %v38
  %455 = vmatprep.subr.mxu0 0.0
  %456 = vmatpush1.msra.mxu0 %v39
  %457 = vmatprep.subr.mxu0 0.0
  %458 = vmatpush1.msra.mxu0 %v40
  %459 = vmatprep.subr.mxu0 0.0
  %460 = vmatpush1.msra.mxu0 %v41
  %461 = vmatprep.subr.mxu0 0.0
  %462 = vmatpush1.msra.mxu0 %v42
  %463 = vmatprep.subr.mxu0 0.0
  %464 = vmatpush1.msra.mxu0 %v43
  %465 = vmatprep.subr.mxu0 0.0
  %466 = vmatpush1.msra.mxu0 %v44
  %467 = vmatprep.subr.mxu0 0.0
  %468 = vmatpush1.msra.mxu0 %v45
  %469 = vmatprep.subr.mxu0 0.0
  %470 = vmatpush1.msra.mxu0 %v46
  %471 = vmatprep.subr.mxu0 0.0
  %472 = vmatpush1.msra.mxu0 %v47
  %473 = vmatprep.subr.mxu0 0.0
  %474 = vmatpush1.msra.mxu0 %v48
  %475 = vmatprep.subr.mxu0 0.0
  %476 = vmatpush1.msra.mxu0 %v49
  %477 = vmatprep.subr.mxu0 0.0
  %478 = vmatpush1.msra.mxu0 %v50
  %479 = vmatprep.subr.mxu0 0.0
  %480 = vmatpush1.msra.mxu0 %v51
  %481 = vmatprep.subr.mxu0 0.0
  %482 = vmatpush1.msra.mxu0 0.0
  %483 = vmatprep.subr.mxu0 0.0
  %484 = vmatpush1.msra.mxu0 0.0
  %485 = vmatprep.subr.mxu0 0.0
  %486 = vmatpush1.msra.mxu0 0.0
  %487 = vmatprep.subr.mxu0 0.0
  %488 = vmatpush1.msra.mxu0 0.0
  %489 = vmatprep.subr.mxu0 0.0
  %490 = vmatpush1.msra.mxu0 0.0
  %491 = vmatprep.subr.mxu0 0.0
  %492 = vmatpush1.msra.mxu0 0.0
  %493 = vmatprep.subr.mxu0 0.0
  %494 = vmatpush1.msra.mxu0 0.0
  %495 = vmatprep.subr.mxu0 0.0
  %496 = vmatpush1.msra.mxu0 0.0
  %497 = vmatprep.subr.mxu0 0.0
  %498 = vmatpush1.msra.mxu0 0.0
  %499 = vmatprep.subr.mxu0 0.0
  %500 = vmatpush1.msra.mxu0 0.0
  %501 = vmatprep.subr.mxu0 0.0
  %502 = vmatpush1.msra.mxu0 0.0
  %503 = vmatprep.subr.mxu0 0.0
  %504 = vmatpush1.msra.mxu0 0.0
  %505 = vmatprep.subr.mxu0 0.0
  %506 = vmatpush1.msra.mxu0 0.0
  %507 = vmatprep.subr.mxu0 0.0
  %508 = vmatpush1.msra.mxu0 0.0
  %509 = vmatprep.subr.mxu0 0.0
  %510 = vmatpush1.msra.mxu0 0.0
  %511 = vmatprep.subr.mxu0 0.0
  %512 = vmatpush1.msra.mxu0 0.0
  %513 = vmatprep.mubr.f32.mxu0 0.0
  %514 = vmatmul.mubr.f32.gmra.mrb[0].mxu0 %v448
  %v515 = vpop.f32.mrb[0].mxu0
  %v516 = vadd.f32 0.0, %v515
  %v517 = vpop.f32.mrb[0].mxu0
  %518 = vdwg.mxu0
  %v519 = vmul.f32 %v516, 0.001953125
  %v520 = vadd.f32 %v519, 1e-05
  %v521 = vrsqrt.pop %v520
  %v522 = vmul.f32 %v346, %v521
  %v524 = vlaneseq
  %v525 = vshrl.u32 %v524, 7
  %v526 = vsub.s32 0, %v525
  %v527 = vrot.slane %v522, %v526
  %v529 = vmul.f32 %v432, %v527
  %v530 = vmul.f32 %v433, %v527
  %v531 = vmul.f32 %v434, %v527
  %v532 = vmul.f32 %v435, %v527
  %v534 = vlaneseq
  %v535 = vshrl.u32 %v534, 7
  %v536 = vsub.s32 0, %v535
  %v537 = vrot.slane %v347, %v536
  %v539 = vadd.f32 %v529, %v537
  %v540 = vadd.f32 %v530, %v537
  %v541 = vadd.f32 %v531, %v537
  %v542 = vadd.f32 %v532, %v537
  %v543 = vmax.f32 %v539, 0.0
  %v544 = vmax.f32 %v540, 0.0
  %v545 = vmax.f32 %v541, 0.0
  %v546 = vmax.f32 %v542, 0.0
  %v547 = vld [vmem:[%s6] sm:$0x1]
  %v548 = vrot.slane %v543, 7
  %v549 = vrot.slane %v544, 7
  %v550 = vrot.slane %v545, 7
  %v551 = vrot.slane %v546, 7
  %v552 = vsel %vm126, %v550, %v551
  %v553 = vsel %vm126, %v549, %v550
  %v554 = vsel %vm126, %v548, %v549
  %v555 = vsel %vm126, %v551, %v548
  %v556 = vsel %vm135, %v555, 0.0
  %v557 = vsel %vm136, %v554, 0.0
  %v558 = vsel %vm137, %v553, 0.0
  %v559 = vsel %vm138, %v552, 0.0
  %v560 = vrot.slane %v543, 1
  %v561 = vrot.slane %v544, 1
  %v562 = vrot.slane %v545, 1
  %v563 = vrot.slane %v546, 1
  %v564 = vsel %vm147, %v562, %v563
  %v565 = vsel %vm147, %v561, %v562
  %v566 = vsel %vm147, %v560, %v561
  %v567 = vsel %vm147, %v563, %v560
  %v568 = vsel %vm156, %v566, 0.0
  %v569 = vsel %vm157, %v565, 0.0
  %v570 = vsel %vm158, %v564, 0.0
  %v571 = vsel %vm159, %v567, 0.0
  %v572 = vpack.c.bf16 %v557, %v556
  %v573 = vpack.c.bf16 %v544, %v543
  %v574 = vpack.c.bf16 %v569, %v568
  %v575 = vpack.c.bf16 %v559, %v558
  %v576 = vpack.c.bf16 %v546, %v545
  %v577 = vpack.c.bf16 %v571, %v570
  %v578 = vld [vmem:[%s5] sm:$0xf]
  %v579 = vld [vmem:[%s5 + $0x4] sm:$0xf]
  %v580 = vld [vmem:[%s5 + $0x8] sm:$0xf]
  %v581 = vld [vmem:[%s5 + $0xc] sm:$0xf]
  %v582 = vld [vmem:[%s5 + $0x10] sm:$0xf]
  %v583 = vld [vmem:[%s5 + $0x14] sm:$0xf]
  %v584 = vld [vmem:[%s5 + $0x18] sm:$0xf]
  %v585 = vld [vmem:[%s5 + $0x1c] sm:$0xf]
  %v586 = vld [vmem:[%s5 + $0x20] sm:$0xf]
  %v587 = vld [vmem:[%s5 + $0x24] sm:$0xf]
  %v588 = vld [vmem:[%s5 + $0x28] sm:$0xf]
  %v589 = vld [vmem:[%s5 + $0x2c] sm:$0xf]
  %v590 = vld [vmem:[%s5 + $0x30] sm:$0xf]
  %v591 = vld [vmem:[%s5 + $0x34] sm:$0xf]
  %v592 = vld [vmem:[%s5 + $0x38] sm:$0xf]
  %v593 = vld [vmem:[%s5 + $0x3c] sm:$0xf]
  %v594 = vld [vmem:[%s5 + $0x40] sm:$0xf]
  %v595 = vld [vmem:[%s5 + $0x44] sm:$0xf]
  %v596 = vld [vmem:[%s5 + $0x48] sm:$0xf]
  %v597 = vld [vmem:[%s5 + $0x4c] sm:$0xf]
  %v598 = vld [vmem:[%s5 + $0x50] sm:$0xf]
  %v599 = vld [vmem:[%s5 + $0x54] sm:$0xf]
  %v600 = vld [vmem:[%s5 + $0x58] sm:$0xf]
  %v601 = vld [vmem:[%s5 + $0x5c] sm:$0xf]
  %v602 = vld [vmem:[%s5 + $0x60] sm:$0xf]
  %v603 = vld [vmem:[%s5 + $0x64] sm:$0xf]
  %v604 = vld [vmem:[%s5 + $0x68] sm:$0xf]
  %v605 = vld [vmem:[%s5 + $0x6c] sm:$0xf]
  %v606 = vld [vmem:[%s5 + $0x70] sm:$0xf]
  %v607 = vld [vmem:[%s5 + $0x74] sm:$0xf]
  %v608 = vld [vmem:[%s5 + $0x78] sm:$0xf]
  %v609 = vld [vmem:[%s5 + $0x7c] sm:$0xf]
  %v610 = vld [vmem:[%s5 + $0x80] sm:$0xf]
  %v611 = vld [vmem:[%s5 + $0x84] sm:$0xf]
  %v612 = vld [vmem:[%s5 + $0x88] sm:$0xf]
  %v613 = vld [vmem:[%s5 + $0x8c] sm:$0xf]
  %v614 = vld [vmem:[%s5 + $0x90] sm:$0xf]
  %v615 = vld [vmem:[%s5 + $0x94] sm:$0xf]
  %v616 = vld [vmem:[%s5 + $0x98] sm:$0xf]
  %v617 = vld [vmem:[%s5 + $0x9c] sm:$0xf]
  %v618 = vld [vmem:[%s5 + $0xa0] sm:$0xf]
  %v619 = vld [vmem:[%s5 + $0xa4] sm:$0xf]
  %v620 = vld [vmem:[%s5 + $0xa8] sm:$0xf]
  %v621 = vld [vmem:[%s5 + $0xac] sm:$0xf]
  %v622 = vld [vmem:[%s5 + $0xb0] sm:$0xf]
  %v623 = vld [vmem:[%s5 + $0xb4] sm:$0xf]
  %v624 = vld [vmem:[%s5 + $0xb8] sm:$0xf]
  %v625 = vld [vmem:[%s5 + $0xbc] sm:$0xf]
  %v627 = vlaneseq
  %v628 = vshrl.u32 %v627, 7
  %v629 = vsub.s32 0, %v628
  %v630 = vrot.slane %v547, %v629
  %v680 = vunpack.c.l.b16 %v578
  %v681 = vunpack.c.l.b16 %v579
  %v682 = vunpack.c.l.b16 %v580
  %v683 = vunpack.c.l.b16 %v581
  %v684 = vunpack.c.l.b16 %v582
  %v685 = vunpack.c.l.b16 %v583
  %v686 = vunpack.c.l.b16 %v584
  %v687 = vunpack.c.l.b16 %v585
  %v688 = vunpack.c.l.b16 %v586
  %v689 = vunpack.c.l.b16 %v587
  %v690 = vunpack.c.l.b16 %v588
  %v691 = vunpack.c.l.b16 %v589
  %v692 = vunpack.c.l.b16 %v590
  %v693 = vunpack.c.l.b16 %v591
  %v694 = vunpack.c.l.b16 %v592
  %v695 = vunpack.c.l.b16 %v593
  %v696 = vunpack.c.l.b16 %v594
  %v697 = vunpack.c.l.b16 %v595
  %v698 = vunpack.c.l.b16 %v596
  %v699 = vunpack.c.l.b16 %v597
  %v700 = vunpack.c.l.b16 %v598
  %v701 = vunpack.c.l.b16 %v599
  %v702 = vunpack.c.l.b16 %v600
  %v703 = vunpack.c.l.b16 %v601
  %v704 = vunpack.c.l.b16 %v602
  %v705 = vunpack.c.l.b16 %v603
  %v706 = vunpack.c.l.b16 %v604
  %v707 = vunpack.c.l.b16 %v605
  %v708 = vunpack.c.l.b16 %v606
  %v709 = vunpack.c.l.b16 %v607
  %v710 = vunpack.c.l.b16 %v608
  %v711 = vunpack.c.l.b16 %v609
  %v712 = vunpack.c.l.b16 %v610
  %v713 = vunpack.c.l.b16 %v611
  %v714 = vunpack.c.l.b16 %v612
  %v715 = vunpack.c.l.b16 %v613
  %v716 = vunpack.c.l.b16 %v614
  %v717 = vunpack.c.l.b16 %v615
  %v718 = vunpack.c.l.b16 %v616
  %v719 = vunpack.c.l.b16 %v617
  %v720 = vunpack.c.l.b16 %v618
  %v721 = vunpack.c.l.b16 %v619
  %v722 = vunpack.c.l.b16 %v620
  %v723 = vunpack.c.l.b16 %v621
  %v724 = vunpack.c.l.b16 %v622
  %v725 = vunpack.c.l.b16 %v623
  %v726 = vunpack.c.l.b16 %v624
  %v727 = vunpack.c.l.b16 %v625
  %v728 = vpack.c.b16 %v681, %v680
  %v729 = vpack.c.b16 %v683, %v682
  %v730 = vpack.c.b16 %v685, %v684
  %v731 = vpack.c.b16 %v687, %v686
  %v732 = vpack.c.b16 %v689, %v688
  %v733 = vpack.c.b16 %v691, %v690
  %v734 = vpack.c.b16 %v693, %v692
  %v735 = vpack.c.b16 %v695, %v694
  %v736 = vpack.c.b16 %v697, %v696
  %v737 = vpack.c.b16 %v699, %v698
  %v738 = vpack.c.b16 %v701, %v700
  %v739 = vpack.c.b16 %v703, %v702
  %v740 = vpack.c.b16 %v705, %v704
  %v741 = vpack.c.b16 %v707, %v706
  %v742 = vpack.c.b16 %v709, %v708
  %v743 = vpack.c.b16 %v711, %v710
  %v744 = vpack.c.b16 %v713, %v712
  %v745 = vpack.c.b16 %v715, %v714
  %v746 = vpack.c.b16 %v717, %v716
  %v747 = vpack.c.b16 %v719, %v718
  %v748 = vpack.c.b16 %v721, %v720
  %v749 = vpack.c.b16 %v723, %v722
  %v750 = vpack.c.b16 %v725, %v724
  %v751 = vpack.c.b16 %v727, %v726
  %776 = vmatprep.subr.bf16.mxu0 0
  %777 = vmatpush1.bf16.msra.mxu0 %v728
  %778 = vmatprep.subr.bf16.mxu0 0
  %779 = vmatpush1.bf16.msra.mxu0 %v729
  %780 = vmatprep.subr.bf16.mxu0 0
  %781 = vmatpush1.bf16.msra.mxu0 %v730
  %782 = vmatprep.subr.bf16.mxu0 0
  %783 = vmatpush1.bf16.msra.mxu0 %v731
  %784 = vmatprep.subr.bf16.mxu0 0
  %785 = vmatpush1.bf16.msra.mxu0 %v732
  %786 = vmatprep.subr.bf16.mxu0 0
  %787 = vmatpush1.bf16.msra.mxu0 %v733
  %788 = vmatprep.subr.bf16.mxu0 0
  %789 = vmatpush1.bf16.msra.mxu0 %v734
  %790 = vmatprep.subr.bf16.mxu0 0
  %791 = vmatpush1.bf16.msra.mxu0 %v735
  %792 = vmatprep.subr.bf16.mxu0 0
  %793 = vmatpush1.bf16.msra.mxu0 %v736
  %794 = vmatprep.subr.bf16.mxu0 0
  %795 = vmatpush1.bf16.msra.mxu0 %v737
  %796 = vmatprep.subr.bf16.mxu0 0
  %797 = vmatpush1.bf16.msra.mxu0 %v738
  %798 = vmatprep.subr.bf16.mxu0 0
  %799 = vmatpush1.bf16.msra.mxu0 %v739
  %800 = vmatprep.subr.bf16.mxu0 0
  %801 = vmatpush1.bf16.msra.mxu0 %v740
  %802 = vmatprep.subr.bf16.mxu0 0
  %803 = vmatpush1.bf16.msra.mxu0 %v741
  %804 = vmatprep.subr.bf16.mxu0 0
  %805 = vmatpush1.bf16.msra.mxu0 %v742
  %806 = vmatprep.subr.bf16.mxu0 0
  %807 = vmatpush1.bf16.msra.mxu0 %v743
  %808 = vmatprep.mubr.bf16.mxu0 %v573
  %809 = vmatmul.mubr.bf16.gmra.mrb[0].mxu0 %v572
  %v810 = vpop.f32.mrb[0].mxu0
  %v811 = vadd.f32 %v630, %v810
  %v812 = vpop.f32.mrb[0].mxu0
  %v813 = vpop.f32.mrb[0].mxu0
  %v814 = vadd.f32 %v630, %v813
  %v815 = vpop.f32.mrb[0].mxu0
  %816 = vmatprep.mubr.bf16.mxu0 %v576
  %817 = vmatmul.mubr.bf16.gmra.mrb[0].mxu0 %v575
  %v818 = vpop.f32.mrb[0].mxu0
  %v819 = vadd.f32 %v630, %v818
  %v820 = vpop.f32.mrb[0].mxu0
  %v821 = vpop.f32.mrb[0].mxu0
  %v822 = vadd.f32 %v630, %v821
  %v823 = vpop.f32.mrb[0].mxu0
  %824 = vdwg.mxu0
  %825 = vmatprep.subr.bf16.mxu0 0
  %826 = vmatpush1.bf16.msra.mxu0 %v744
  %827 = vmatprep.subr.bf16.mxu0 0
  %828 = vmatpush1.bf16.msra.mxu0 %v745
  %829 = vmatprep.subr.bf16.mxu0 0
  %830 = vmatpush1.bf16.msra.mxu0 %v746
  %831 = vmatprep.subr.bf16.mxu0 0
  %832 = vmatpush1.bf16.msra.mxu0 %v747
  %833 = vmatprep.subr.bf16.mxu0 0
  %834 = vmatpush1.bf16.msra.mxu0 %v748
  %835 = vmatprep.subr.bf16.mxu0 0
  %836 = vmatpush1.bf16.msra.mxu0 %v749
  %837 = vmatprep.subr.bf16.mxu0 0
  %838 = vmatpush1.bf16.msra.mxu0 %v750
  %839 = vmatprep.subr.bf16.mxu0 0
  %840 = vmatpush1.bf16.msra.mxu0 %v751
  %841 = vmatprep.subr.bf16.mxu0 0
  %842 = vmatpush1.bf16.msra.mxu0 0
  %843 = vmatprep.subr.bf16.mxu0 0
  %844 = vmatpush1.bf16.msra.mxu0 0
  %845 = vmatprep.subr.bf16.mxu0 0
  %846 = vmatpush1.bf16.msra.mxu0 0
  %847 = vmatprep.subr.bf16.mxu0 0
  %848 = vmatpush1.bf16.msra.mxu0 0
  %849 = vmatprep.subr.bf16.mxu0 0
  %850 = vmatpush1.bf16.msra.mxu0 0
  %851 = vmatprep.subr.bf16.mxu0 0
  %852 = vmatpush1.bf16.msra.mxu0 0
  %853 = vmatprep.subr.bf16.mxu0 0
  %854 = vmatpush1.bf16.msra.mxu0 0
  %855 = vmatprep.subr.bf16.mxu0 0
  %856 = vmatpush1.bf16.msra.mxu0 0
  %857 = vmatprep.mubr.bf16.mxu0 0
  %858 = vmatmul.mubr.bf16.gmra.mrb[0].mxu0 %v574
  %v859 = vpop.f32.mrb[0].mxu0
  %v860 = vadd.f32 %v811, %v859
  %v861 = vpop.f32.mrb[0].mxu0
  %v862 = vpop.f32.mrb[0].mxu0
  %v863 = vadd.f32 %v814, %v862
  %v864 = vpop.f32.mrb[0].mxu0
  %865 = vmatprep.mubr.bf16.mxu0 0
  %866 = vmatmul.mubr.bf16.gmra.mrb[0].mxu0 %v577
  %v867 = vpop.f32.mrb[0].mxu0
  %v868 = vadd.f32 %v819, %v867
  %v869 = vpop.f32.mrb[0].mxu0
  %v870 = vpop.f32.mrb[0].mxu0
  %v871 = vadd.f32 %v822, %v870
  %v872 = vpop.f32.mrb[0].mxu0
  %873 = vdwg.mxu0
  %v874 = vld [vmem:[%s7] sm:$0x1]
  %v875 = vld [vmem:[%s8] sm:$0x1]
  %v876 = vadd.f32 %v860, %v863
  %v877 = vadd.f32 %v876, %v868
  %v878 = vadd.f32 %v877, %v871
  %v879 = vrot.slane %v878, 4
  %v880 = vadd.f32 %v878, %v879
  %v881 = vrot.slane %v880, 2
  %v882 = vadd.f32 %v880, %v881
  %v883 = vrot.slane %v882, 1
  %v884 = vadd.f32 %v882, %v883
  %885 = vmatprep.subr.mxu0 0.0
  %886 = vmatpush1.msra.mxu0 %v36
  %887 = vmatprep.subr.mxu0 0.0
  %888 = vmatpush1.msra.mxu0 %v37
  %889 = vmatprep.subr.mxu0 0.0
  %890 = vmatpush1.msra.mxu0 %v38
  %891 = vmatprep.subr.mxu0 0.0
  %892 = vmatpush1.msra.mxu0 %v39
  %893 = vmatprep.subr.mxu0 0.0
  %894 = vmatpush1.msra.mxu0 %v40
  %895 = vmatprep.subr.mxu0 0.0
  %896 = vmatpush1.msra.mxu0 %v41
  %897 = vmatprep.subr.mxu0 0.0
  %898 = vmatpush1.msra.mxu0 %v42
  %899 = vmatprep.subr.mxu0 0.0
  %900 = vmatpush1.msra.mxu0 %v43
  %901 = vmatprep.subr.mxu0 0.0
  %902 = vmatpush1.msra.mxu0 %v44
  %903 = vmatprep.subr.mxu0 0.0
  %904 = vmatpush1.msra.mxu0 %v45
  %905 = vmatprep.subr.mxu0 0.0
  %906 = vmatpush1.msra.mxu0 %v46
  %907 = vmatprep.subr.mxu0 0.0
  %908 = vmatpush1.msra.mxu0 %v47
  %909 = vmatprep.subr.mxu0 0.0
  %910 = vmatpush1.msra.mxu0 %v48
  %911 = vmatprep.subr.mxu0 0.0
  %912 = vmatpush1.msra.mxu0 %v49
  %913 = vmatprep.subr.mxu0 0.0
  %914 = vmatpush1.msra.mxu0 %v50
  %915 = vmatprep.subr.mxu0 0.0
  %916 = vmatpush1.msra.mxu0 %v51
  %917 = vmatprep.subr.mxu0 0.0
  %918 = vmatpush1.msra.mxu0 0.0
  %919 = vmatprep.subr.mxu0 0.0
  %920 = vmatpush1.msra.mxu0 0.0
  %921 = vmatprep.subr.mxu0 0.0
  %922 = vmatpush1.msra.mxu0 0.0
  %923 = vmatprep.subr.mxu0 0.0
  %924 = vmatpush1.msra.mxu0 0.0
  %925 = vmatprep.subr.mxu0 0.0
  %926 = vmatpush1.msra.mxu0 0.0
  %927 = vmatprep.subr.mxu0 0.0
  %928 = vmatpush1.msra.mxu0 0.0
  %929 = vmatprep.subr.mxu0 0.0
  %930 = vmatpush1.msra.mxu0 0.0
  %931 = vmatprep.subr.mxu0 0.0
  %932 = vmatpush1.msra.mxu0 0.0
  %933 = vmatprep.subr.mxu0 0.0
  %934 = vmatpush1.msra.mxu0 0.0
  %935 = vmatprep.subr.mxu0 0.0
  %936 = vmatpush1.msra.mxu0 0.0
  %937 = vmatprep.subr.mxu0 0.0
  %938 = vmatpush1.msra.mxu0 0.0
  %939 = vmatprep.subr.mxu0 0.0
  %940 = vmatpush1.msra.mxu0 0.0
  %941 = vmatprep.subr.mxu0 0.0
  %942 = vmatpush1.msra.mxu0 0.0
  %943 = vmatprep.subr.mxu0 0.0
  %944 = vmatpush1.msra.mxu0 0.0
  %945 = vmatprep.subr.mxu0 0.0
  %946 = vmatpush1.msra.mxu0 0.0
  %947 = vmatprep.subr.mxu0 0.0
  %948 = vmatpush1.msra.mxu0 0.0
  %949 = vmatprep.mubr.f32.mxu0 0.0
  %950 = vmatmul.mubr.f32.gmra.mrb[0].mxu0 %v884
  %v951 = vpop.f32.mrb[0].mxu0
  %v952 = vadd.f32 0.0, %v951
  %v953 = vpop.f32.mrb[0].mxu0
  %954 = vdwg.mxu0
  %v955 = vmul.f32 %v952, 0.001953125
  %v956 = vlaneseq
  %v957 = vshrl.u32 %v956, 7
  %v958 = vsub.s32 0, %v957
  %v959 = vrot.slane %v955, %v958
  %v960 = vsub.f32 %v860, %v959
  %v961 = vsub.f32 %v863, %v959
  %v962 = vsub.f32 %v868, %v959
  %v963 = vsub.f32 %v871, %v959
  %v964 = vmul.f32 %v960, %v960
  %v965 = vmul.f32 %v961, %v961
  %v966 = vmul.f32 %v962, %v962
  %v967 = vmul.f32 %v963, %v963
  %v968 = vadd.f32 %v964, %v965
  %v969 = vadd.f32 %v968, %v966
  %v970 = vadd.f32 %v969, %v967
  %v971 = vrot.slane %v970, 4
  %v972 = vadd.f32 %v970, %v971
  %v973 = vrot.slane %v972, 2
  %v974 = vadd.f32 %v972, %v973
  %v975 = vrot.slane %v974, 1
  %v976 = vadd.f32 %v974, %v975
  %977 = vmatprep.subr.mxu0 0.0
  %978 = vmatpush1.msra.mxu0 %v36
  %979 = vmatprep.subr.mxu0 0.0
  %980 = vmatpush1.msra.mxu0 %v37
  %981 = vmatprep.subr.mxu0 0.0
  %982 = vmatpush1.msra.mxu0 %v38
  %983 = vmatprep.subr.mxu0 0.0
  %984 = vmatpush1.msra.mxu0 %v39
  %985 = vmatprep.subr.mxu0 0.0
  %986 = vmatpush1.msra.mxu0 %v40
  %987 = vmatprep.subr.mxu0 0.0
  %988 = vmatpush1.msra.mxu0 %v41
  %989 = vmatprep.subr.mxu0 0.0
  %990 = vmatpush1.msra.mxu0 %v42
  %991 = vmatprep.subr.mxu0 0.0
  %992 = vmatpush1.msra.mxu0 %v43
  %993 = vmatprep.subr.mxu0 0.0
  %994 = vmatpush1.msra.mxu0 %v44
  %995 = vmatprep.subr.mxu0 0.0
  %996 = vmatpush1.msra.mxu0 %v45
  %997 = vmatprep.subr.mxu0 0.0
  %998 = vmatpush1.msra.mxu0 %v46
  %999 = vmatprep.subr.mxu0 0.0
  %1000 = vmatpush1.msra.mxu0 %v47
  %1001 = vmatprep.subr.mxu0 0.0
  %1002 = vmatpush1.msra.mxu0 %v48
  %1003 = vmatprep.subr.mxu0 0.0
  %1004 = vmatpush1.msra.mxu0 %v49
  %1005 = vmatprep.subr.mxu0 0.0
  %1006 = vmatpush1.msra.mxu0 %v50
  %1007 = vmatprep.subr.mxu0 0.0
  %1008 = vmatpush1.msra.mxu0 %v51
  %1009 = vmatprep.subr.mxu0 0.0
  %1010 = vmatpush1.msra.mxu0 0.0
  %1011 = vmatprep.subr.mxu0 0.0
  %1012 = vmatpush1.msra.mxu0 0.0
  %1013 = vmatprep.subr.mxu0 0.0
  %1014 = vmatpush1.msra.mxu0 0.0
  %1015 = vmatprep.subr.mxu0 0.0
  %1016 = vmatpush1.msra.mxu0 0.0
  %1017 = vmatprep.subr.mxu0 0.0
  %1018 = vmatpush1.msra.mxu0 0.0
  %1019 = vmatprep.subr.mxu0 0.0
  %1020 = vmatpush1.msra.mxu0 0.0
  %1021 = vmatprep.subr.mxu0 0.0
  %1022 = vmatpush1.msra.mxu0 0.0
  %1023 = vmatprep.subr.mxu0 0.0
  %1024 = vmatpush1.msra.mxu0 0.0
  %1025 = vmatprep.subr.mxu0 0.0
  %1026 = vmatpush1.msra.mxu0 0.0
  %1027 = vmatprep.subr.mxu0 0.0
  %1028 = vmatpush1.msra.mxu0 0.0
  %1029 = vmatprep.subr.mxu0 0.0
  %1030 = vmatpush1.msra.mxu0 0.0
  %1031 = vmatprep.subr.mxu0 0.0
  %1032 = vmatpush1.msra.mxu0 0.0
  %1033 = vmatprep.subr.mxu0 0.0
  %1034 = vmatpush1.msra.mxu0 0.0
  %1035 = vmatprep.subr.mxu0 0.0
  %1036 = vmatpush1.msra.mxu0 0.0
  %1037 = vmatprep.subr.mxu0 0.0
  %1038 = vmatpush1.msra.mxu0 0.0
  %1039 = vmatprep.subr.mxu0 0.0
  %1040 = vmatpush1.msra.mxu0 0.0
  %1041 = vmatprep.mubr.f32.mxu0 0.0
  %1042 = vmatmul.mubr.f32.gmra.mrb[0].mxu0 %v976
  %v1043 = vpop.f32.mrb[0].mxu0
  %v1044 = vadd.f32 0.0, %v1043
  %v1045 = vpop.f32.mrb[0].mxu0
  %1046 = vdwg.mxu0
  %v1047 = vmul.f32 %v1044, 0.001953125
  %v1048 = vadd.f32 %v1047, 1e-05
  %v1049 = vrsqrt.pop %v1048
  %v1050 = vmul.f32 %v874, %v1049
  %v1052 = vlaneseq
  %v1053 = vshrl.u32 %v1052, 7
  %v1054 = vsub.s32 0, %v1053
  %v1055 = vrot.slane %v1050, %v1054
  %v1057 = vmul.f32 %v960, %v1055
  %v1058 = vmul.f32 %v961, %v1055
  %v1059 = vmul.f32 %v962, %v1055
  %v1060 = vmul.f32 %v963, %v1055
  %v1062 = vlaneseq
  %v1063 = vshrl.u32 %v1062, 7
  %v1064 = vsub.s32 0, %v1063
  %v1065 = vrot.slane %v875, %v1064
  %v1067 = vadd.f32 %v1057, %v1065
  %v1068 = vadd.f32 %v1058, %v1065
  %v1069 = vadd.f32 %v1059, %v1065
  %v1070 = vadd.f32 %v1060, %v1065
  %v1071 = vmax.f32 %v1067, 0.0
  %v1072 = vmax.f32 %v1068, 0.0
  %v1073 = vmax.f32 %v1069, 0.0
  %v1074 = vmax.f32 %v1070, 0.0
  %1075 = vst [vmem:[%s10] sm:$0xff] %v1071
  %1076 = vst [vmem:[%s10 + $0x8] sm:$0xff] %v1072
  %1077 = vst [vmem:[%s10 + $0x10] sm:$0xff] %v1073
  %1078 = vst [vmem:[%s10 + $0x18] sm:$0xff] %v1074
  // Predicated region
  $region42: #{conv_block_forward.1} parent=0 // pred_check
    _
  $region43: #{conv_block_forward.1} parent=0 // pred_check_branch
    %1080 = sbr.rel (0) target = $region45
  $region44: #{conv_block_forward.1} parent=0 // pred_region
    _
  $region45: #{conv_block_forward.1} parent=0 // pred_fallthru
    _
  // Predicated region
  $region46: #{conv_block_forward.1} parent=0 // pred_check
    _
  $region47: #{conv_block_forward.1} parent=0 // pred_check_branch
    %1082 = sbr.rel (0) target = $region49
  $region48: #{conv_block_forward.1} parent=0 // pred_region
    _
  $region49: #{conv_block_forward.1} parent=0 // pred_fallthru
    _

</llo_original>
